<compile_context>
chip_gen: v6e
topology: v6e:2x2x1
jax: 0.10.0
libtpu: 0.0.40
codegen_flags: <defaults>
</compile_context>

<pallas_src>
import math

import jax
import jax.numpy as jnp
from jax.experimental import pallas as pl
from jax.experimental.pallas import tpu as pltpu  # noqa: F401  (TPU backend)


# ----------------------------------------------------------------------------
# Pallas kernel: 3-layer 1x1-conv MLP (BN folded, concat + decode-scales folded
# into the weights) over all B*K proposals in one MXU chain.
# ----------------------------------------------------------------------------
def _proposal_head_kernel(x_ref, w1_ref, b1_ref, w2_ref, b2_ref,
                          w3_ref, b3_ref, o_ref):
    x = x_ref[...]                                              # (BK, 256) bf16

    # conv1 (+ folded bn1) + relu — single 256-deep contraction.
    h1 = jnp.dot(x, w1_ref[...], preferred_element_type=jnp.float32) + b1_ref[...]
    h1 = jnp.maximum(h1, 0.0)

    # conv2 (+ folded bn2) + relu
    h2 = jnp.dot(h1.astype(jnp.bfloat16), w2_ref[...],
                 preferred_element_type=jnp.float32) + b2_ref[...]
    h2 = jnp.maximum(h2, 0.0)

    # conv3 (no bn / relu) — 128-lane padded output; padding lanes carry the
    # pre-scaled heading/size residual columns (decode_scores folded in).
    net = jnp.dot(h2.astype(jnp.bfloat16), w3_ref[...],
                  preferred_element_type=jnp.float32) + b3_ref[...]
    o_ref[...] = net


def proposal_head(x_bk_c, w1, b1, w2, b2, w3p, b3p):
    """x_bk_c: (B*K, 256) bf16 channels-last.  Returns (B*K, 128) f32."""
    bk, c_in = x_bk_c.shape
    c_hid = w1.shape[1]
    c_pad = w3p.shape[1]
    cost = pl.CostEstimate(
        flops=2 * bk * (c_in * c_hid + c_hid * c_hid + c_hid * c_pad),
        transcendentals=0,
        bytes_accessed=(x_bk_c.size * 2
                        + (w1.size + w2.size + w3p.size) * 2
                        + (b1.size + b2.size + b3p.size) * 4
                        + bk * c_pad * 4))
    # Whole problem (< 0.5 MiB) fits in VMEM -> single launch, no grid; the
    # default BlockSpecs map each full array into VMEM.
    return pl.pallas_call(
        _proposal_head_kernel,
        out_shape=jax.ShapeDtypeStruct((bk, c_pad), jnp.float32),
        cost_estimate=cost,
    )(x_bk_c, w1, b1, w2, b2, w3p, b3p)


# ----------------------------------------------------------------------------
# ProposalModule (proposal head) wrapper
# ----------------------------------------------------------------------------
class ProposalModulePallas:
    def __init__(self, num_class, num_heading_bin, num_size_cluster,
                 mean_size_arr, num_proposal, key):
        self.num_class = num_class
        self.num_heading_bin = num_heading_bin
        self.num_size_cluster = num_size_cluster
        self.num_proposal = num_proposal

        nh, ns = num_heading_bin, num_size_cluster
        c_in = 128 + 128
        c_out = 2 + 3 + nh * 2 + ns * 4 + num_class
        self.c_out = c_out
        # Extra (pre-scaled) columns appended after the c_out valid ones:
        #   [c_out, c_out+nh)          -> heading_residuals  (= hrn * pi/nh)
        #   [c_out+nh, c_out+nh+3*ns)  -> size_residuals     (= srn * mean_size)
        c_valid = c_out + nh + 3 * ns
        c_pad = max(128, ((c_valid + 127) // 128) * 128)
        self.c_pad = c_pad

        ks = jax.random.split(key, 10)
        s = 0.02
        # conv weights stored as (Cin, Cout) for channels-last matmul
        w1 = jax.random.normal(ks[0], (c_in, 128), jnp.float32) * s
        b1 = jax.random.normal(ks[1], (128,), jnp.float32) * s
        w2 = jax.random.normal(ks[2], (128, 128), jnp.float32) * s
        b2 = jax.random.normal(ks[3], (128,), jnp.float32) * s
        w3 = jax.random.normal(ks[4], (128, c_out), jnp.float32) * s
        b3 = jax.random.normal(ks[5], (c_out,), jnp.float32) * s

        # BatchNorm1d params (eval mode), folded into conv1/conv2
        eps = 1e-5
        g1 = 1.0 + jax.random.normal(ks[6], (128,), jnp.float32) * 0.01
        be1 = jax.random.normal(ks[7], (128,), jnp.float32) * 0.01
        g2 = 1.0 + jax.random.normal(ks[8], (128,), jnp.float32) * 0.01
        be2 = jax.random.normal(ks[9], (128,), jnp.float32) * 0.01
        rm1 = jnp.zeros((128,), jnp.float32); rv1 = jnp.ones((128,), jnp.float32)
        rm2 = jnp.zeros((128,), jnp.float32); rv2 = jnp.ones((128,), jnp.float32)

        sc1 = g1 / jnp.sqrt(rv1 + eps)
        sc2 = g2 / jnp.sqrt(rv2 + eps)
        w1f = w1 * sc1[None, :]
        b1f = (b1 - rm1) * sc1 + be1
        w2f = w2 * sc2[None, :]
        b2f = (b2 - rm2) * sc2 + be2

        mean_size = jnp.asarray(mean_size_arr, jnp.float32)        # (ns, 3)
        hd_scale = math.pi / nh
        sz_scale = mean_size.reshape(-1)                           # (3*ns,)

        # Channel offsets (match the PyTorch decode_scores exactly).
        hr0, hr1 = 3 + nh, 3 + 2 * nh
        sr0, sr1 = 3 + 2 * nh + ns, 3 + 2 * nh + 4 * ns
        self._off = (hr0, hr1, sr0, sr1)

        # conv3 weight: valid columns, then pre-scaled residual copies, zero pad.
        w3p = jnp.zeros((128, c_pad), jnp.float32)
        w3p = w3p.at[:, :c_out].set(w3)
        w3p = w3p.at[:, c_out:c_out + nh].set(w3[:, hr0:hr1] * hd_scale)
        w3p = w3p.at[:, c_out + nh:c_out + nh + 3 * ns].set(
            w3[:, sr0:sr1] * sz_scale[None, :])
        b3p = jnp.zeros((c_pad,), jnp.float32)
        b3p = b3p.at[:c_out].set(b3)
        b3p = b3p.at[c_out:c_out + nh].set(b3[hr0:hr1] * hd_scale)
        b3p = b3p.at[c_out + nh:c_out + nh + 3 * ns].set(b3[sr0:sr1] * sz_scale)

        # Kernel-side (bf16 weights, f32 biases as (1, C) rows).
        w1_k = w1f.astype(jnp.bfloat16)
        w2_k = w2f.astype(jnp.bfloat16)
        w3_k = w3p.astype(jnp.bfloat16)
        b1_k = b1f[None, :]
        b2_k = b2f[None, :]
        b3_k = b3p[None, :]

        # f32 reference params (for the tolerance check in __main__).
        self.ref_params = (w1f, b1f, w2f, b2f, w3, b3)
        self.mean_size = mean_size

        nc = num_class

        @jax.jit
        def _fwd(features_nck, rn_feature_nck, base_xyz):
            B, _, K = features_nck.shape
            # NCK -> NKC -> (B*K, 256) bf16: layout + concat done in XLA so the
            # kernel sees a single lane-dense operand.
            x1 = jnp.transpose(features_nck, (0, 2, 1))
            x2 = jnp.transpose(rn_feature_nck, (0, 2, 1))
            x = jnp.concatenate([x1, x2], axis=-1).reshape(B * K, c_in)
            x = x.astype(jnp.bfloat16)

            net_pad = proposal_head(x, w1_k, b1_k, w2_k, b2_k, w3_k, b3_k)
            net = net_pad.reshape(B, K, c_pad)              # free reshape

            out = {}
            out['center'] = base_xyz + net[:, :, 0:3]
            out['heading_scores'] = net[:, :, 3:hr0]
            out['heading_residuals_normalized'] = net[:, :, hr0:hr1]
            out['heading_residuals'] = net[:, :, c_out:c_out + nh]
            out['size_scores'] = net[:, :, hr1:sr0]
            out['size_residuals_normalized'] = net[:, :, sr0:sr1].reshape(
                B, K, ns, 3)
            out['size_residuals'] = net[:, :, c_out + nh:c_out + nh + 3 * ns
                                        ].reshape(B, K, ns, 3)
            out['sem_cls_scores'] = net[:, :, sr1:c_out]    # (2 + num_class)
            return out

        self._fwd = _fwd

    def forward(self, features_nck, rn_feature_nck, end_points):
        # features_nck / rn_feature_nck: (B, 128, K) — PyTorch NCK layout.
        new_entries = self._fwd(features_nck, rn_feature_nck,
                                end_points['aggregated_vote_xyz'])
        end_points.update(new_entries)
        return end_points


# ----------------------------------------------------------------------------
# Pure-JAX f32 reference of the proposal head + decode (for tolerance check)
# ----------------------------------------------------------------------------
def _reference(features_nck, rn_feature_nck, base_xyz, params, mean_size,
               num_heading_bin, num_size_cluster):
    w1f, b1f, w2f, b2f, w3, b3 = params
    B, _, K = features_nck.shape
    nh, ns = num_heading_bin, num_size_cluster
    x = jnp.concatenate([features_nck, rn_feature_nck], axis=1)   # (B, 256, K)
    x = jnp.transpose(x, (0, 2, 1)).reshape(B * K, -1)
    h1 = jnp.maximum(x @ w1f + b1f, 0.0)
    h2 = jnp.maximum(h1 @ w2f + b2f, 0.0)
    net = (h2 @ w3 + b3).reshape(B, K, -1)
    hr0, hr1 = 3 + nh, 3 + 2 * nh
    sr0, sr1 = 3 + 2 * nh + ns, 3 + 2 * nh + 4 * ns
    out = {}
    out['center'] = base_xyz + net[:, :, 0:3]
    out['heading_scores'] = net[:, :, 3:hr0]
    out['heading_residuals_normalized'] = net[:, :, hr0:hr1]
    out['heading_residuals'] = net[:, :, hr0:hr1] * (math.pi / nh)
    out['size_scores'] = net[:, :, hr1:sr0]
    srn = net[:, :, sr0:sr1].reshape(B, K, ns, 3)
    out['size_residuals_normalized'] = srn
    out['size_residuals'] = srn * mean_size[None, None, :, :]
    out['sem_cls_scores'] = net[:, :, sr1:]
    return out


# ----------------------------------------------------------------------------
if __name__ == "__main__":
    key = jax.random.PRNGKey(0)
    k_feat, k_rn, k_xyz, k_ms, k_params = jax.random.split(key, 5)

    B = 2
    num_proposal = 16          # K
    num_heading_bin = 4
    num_size_cluster = 4
    num_class = 6

    mean_size_arr = jax.random.uniform(
        k_ms, (num_size_cluster, 3), jnp.float32, 0.5, 2.0)

    module = ProposalModulePallas(num_class, num_heading_bin, num_size_cluster,
                                  mean_size_arr, num_proposal, k_params)

    # Stand-ins for the outputs of the external sub-modules (see TODOs above).
    features = jax.random.normal(k_feat, (B, 128, num_proposal), jnp.float32)
    rn_feature = jax.random.normal(k_rn, (B, 128, num_proposal), jnp.float32)
    aggregated_vote_xyz = jax.random.normal(
        k_xyz, (B, num_proposal, 3), jnp.float32)

    end_points = {'aggregated_vote_xyz': aggregated_vote_xyz}
    end_points = module.forward(features, rn_feature, end_points)

    jax.block_until_ready(end_points['center'])
    jax.block_until_ready(end_points['size_residuals'])
    jax.block_until_ready(end_points['sem_cls_scores'])

    # Shape checks implied by the PyTorch forward.
    assert end_points['center'].shape == (B, num_proposal, 3)
    assert end_points['heading_scores'].shape == (B, num_proposal, num_heading_bin)
    assert end_points['heading_residuals'].shape == (B, num_proposal, num_heading_bin)
    assert end_points['size_scores'].shape == (B, num_proposal, num_size_cluster)
    assert end_points['size_residuals'].shape == (B, num_proposal, num_size_cluster, 3)
    assert end_points['sem_cls_scores'].shape == (B, num_proposal, 2 + num_class)

    # Numerical check vs. f32 reference (bf16 MXU path -> loose tolerance).
    ref = _reference(features, rn_feature, aggregated_vote_xyz,
                     module.ref_params, module.mean_size,
                     num_heading_bin, num_size_cluster)
    for name in ('center', 'heading_scores', 'heading_residuals',
                 'size_scores', 'size_residuals', 'sem_cls_scores'):
        got = jnp.asarray(end_points[name], jnp.float32)
        want = jnp.asarray(ref[name], jnp.float32)
        assert bool(jnp.allclose(got, want, atol=3e-2, rtol=3e-2)), name

    print("KERNEL_OK")
</pallas_src>

<mosaic_0001>
module attributes {stable_mosaic.version = 11 : i64} {
  func.func @_proposal_head_kernel(%arg0: memref<32x256xbf16, #tpu.memory_space<vmem>>, %arg1: memref<256x128xbf16, #tpu.memory_space<vmem>>, %arg2: memref<1x128xf32, #tpu.memory_space<vmem>>, %arg3: memref<128x128xbf16, #tpu.memory_space<vmem>>, %arg4: memref<1x128xf32, #tpu.memory_space<vmem>>, %arg5: memref<128x128xbf16, #tpu.memory_space<vmem>>, %arg6: memref<1x128xf32, #tpu.memory_space<vmem>>, %arg7: memref<32x128xf32, #tpu.memory_space<vmem>>) attributes {dimension_semantics = [], scalar_prefetch = 0 : i64, scratch_operands = 0 : i64, tpu.core_type = #tpu.core_type<tc>} {
    %c0 = arith.constant 0 : index
    %c0_0 = arith.constant 0 : index
    %0 = vector.load %arg0[%c0, %c0_0] : memref<32x256xbf16, #tpu.memory_space<vmem>>, vector<32x256xbf16>
    %c0_1 = arith.constant 0 : index
    %c0_2 = arith.constant 0 : index
    %1 = vector.load %arg1[%c0_1, %c0_2] : memref<256x128xbf16, #tpu.memory_space<vmem>>, vector<256x128xbf16>
    %cst = arith.constant dense<0.000000e+00> : vector<32x128xf32>
    %2 = tpu.matmul %0, %1, %cst {dimension_numbers = #tpu.dot_dimension_numbers<[1], [0], [0], [1], [0, 0, 1, 1], [], []>} : vector<32x256xbf16>, vector<256x128xbf16>, vector<32x128xf32> -> vector<32x128xf32>
    %c0_3 = arith.constant 0 : index
    %c0_4 = arith.constant 0 : index
    %3 = vector.load %arg2[%c0_3, %c0_4] : memref<1x128xf32, #tpu.memory_space<vmem>>, vector<1x128xf32>
    %4 = vector.broadcast %3 : vector<1x128xf32> to vector<32x128xf32>
    %5 = arith.addf %2, %4 : vector<32x128xf32>
    %cst_5 = arith.constant 0.000000e+00 : f32
    %6 = vector.broadcast %cst_5 : f32 to vector<32x128xf32>
    %7 = arith.maximumf %5, %6 : vector<32x128xf32>
    %8 = arith.truncf %7 : vector<32x128xf32> to vector<32x128xbf16>
    %c0_6 = arith.constant 0 : index
    %c0_7 = arith.constant 0 : index
    %9 = vector.load %arg3[%c0_6, %c0_7] : memref<128x128xbf16, #tpu.memory_space<vmem>>, vector<128x128xbf16>
    %cst_8 = arith.constant dense<0.000000e+00> : vector<32x128xf32>
    %10 = tpu.matmul %8, %9, %cst_8 {dimension_numbers = #tpu.dot_dimension_numbers<[1], [0], [0], [1], [0, 0, 1, 1], [], []>} : vector<32x128xbf16>, vector<128x128xbf16>, vector<32x128xf32> -> vector<32x128xf32>
    %c0_9 = arith.constant 0 : index
    %c0_10 = arith.constant 0 : index
    %11 = vector.load %arg4[%c0_9, %c0_10] : memref<1x128xf32, #tpu.memory_space<vmem>>, vector<1x128xf32>
    %12 = vector.broadcast %11 : vector<1x128xf32> to vector<32x128xf32>
    %13 = arith.addf %10, %12 : vector<32x128xf32>
    %cst_11 = arith.constant 0.000000e+00 : f32
    %14 = vector.broadcast %cst_11 : f32 to vector<32x128xf32>
    %15 = arith.maximumf %13, %14 : vector<32x128xf32>
    %16 = arith.truncf %15 : vector<32x128xf32> to vector<32x128xbf16>
    %c0_12 = arith.constant 0 : index
    %c0_13 = arith.constant 0 : index
    %17 = vector.load %arg5[%c0_12, %c0_13] : memref<128x128xbf16, #tpu.memory_space<vmem>>, vector<128x128xbf16>
    %cst_14 = arith.constant dense<0.000000e+00> : vector<32x128xf32>
    %18 = tpu.matmul %16, %17, %cst_14 {dimension_numbers = #tpu.dot_dimension_numbers<[1], [0], [0], [1], [0, 0, 1, 1], [], []>} : vector<32x128xbf16>, vector<128x128xbf16>, vector<32x128xf32> -> vector<32x128xf32>
    %c0_15 = arith.constant 0 : index
    %c0_16 = arith.constant 0 : index
    %19 = vector.load %arg6[%c0_15, %c0_16] : memref<1x128xf32, #tpu.memory_space<vmem>>, vector<1x128xf32>
    %20 = vector.broadcast %19 : vector<1x128xf32> to vector<32x128xf32>
    %21 = arith.addf %18, %20 : vector<32x128xf32>
    %c0_17 = arith.constant 0 : index
    %c0_18 = arith.constant 0 : index
    %22 = vector.load %arg7[%c0_17, %c0_18] : memref<32x128xf32, #tpu.memory_space<vmem>>, vector<32x128xf32>
    tpu.vector_store %arg7[%c0_17, %c0_18], %21 {strides = array<i32>} : memref<32x128xf32, #tpu.memory_space<vmem>>, vector<32x128xf32>,
    return
  }
}

</mosaic_0001>

<llo_original>
// kernel: _fwd.1
$region0: #{_fwd.1}
  #allocation0 [shape = 'u32[]', space=smem, size = 0x4, offset = 0x4, fixed_abs, tag = 'smem constant byte address 0x4 - core index']
  #allocation1 [shape = 'u32[144,128]{1,0:T(1,128)}', space=vmem, size = 0x12000, scoped, tag = 'internal scratch']
  %s0 = inlined_call_operand.vmem [shape: bf16[32,256], index: 0, kind: input, shape index: {}]
  %s1 = inlined_call_operand.vmem [shape: bf16[256,128], index: 1, kind: input, shape index: {}]
  %s2 = inlined_call_operand.vmem [shape: f32[1,128], index: 2, kind: input, shape index: {}]
  %s3 = inlined_call_operand.hbm [shape: bf16[128,128], index: 3, kind: input, shape index: {}]
  %s4 = inlined_call_operand.vmem [shape: f32[1,128], index: 4, kind: input, shape index: {}]
  %s5 = inlined_call_operand.hbm [shape: bf16[128,128], index: 5, kind: input, shape index: {}]
  %s6 = inlined_call_operand.vmem [shape: f32[1,128], index: 6, kind: input, shape index: {}]
  %s7 = inlined_call_operand.vmem [shape: f32[32,128], index: 7, kind: output, shape index: {}]
  %s8 = sld [smem:[#allocation0]]
  $region46: #{_fwd.1} parent=0
    _
  %s10 = ssub.s32 1, %s8
  %s11 = scalar_select 0, %s10, %s8
  $region1: #{_fwd.1} parent=0
    #allocation2 [shape = 'u8[32768]{0}', space=vmem, size = 0x8000, scoped, tag = 'input window, operand 3, single buffered']
    #allocation3 [shape = 's32[1]{0}', space=sflag, size = 0x4, scoped, tag = 'scoped memory for _fwd.1']
    #allocation4 [shape = 'u8[32768]{0}', space=vmem, size = 0x8000, scoped, tag = 'input window, operand 5, single buffered']
    #allocation5 [shape = 's32[1]{0}', space=sflag, size = 0x4, scoped, tag = 'scoped memory for _fwd.1']
    %12 = vsyncpa [#allocation3], 0
    %13 = vsyncpa [#allocation5], 0
    // Predicated region
    $region2: #{_fwd.1} parent=1 // pred_check
      _
    $region3: #{_fwd.1} parent=1 // pred_check_branch
      %15 = sbr.rel (0) target = $region5
    $region4: #{_fwd.1} parent=1 // pred_region
      _
    $region5: #{_fwd.1} parent=1 // pred_fallthru
      _
    // Predicated region
    $region6: #{_fwd.1} parent=1 // pred_check
      _
    $region7: #{_fwd.1} parent=1 // pred_check_branch
      %17 = sbr.rel (0) target = $region9
    $region8: #{_fwd.1} parent=1 // pred_region
      _
    $region9: #{_fwd.1} parent=1 // pred_fallthru
      _
    // Predicated region
    $region10: #{_fwd.1} parent=1 // pred_check
      _
    $region11: #{_fwd.1} parent=1 // pred_check_branch
      %19 = sbr.rel (0) target = $region13
    $region12: #{_fwd.1} parent=1 // pred_region
      _
    $region13: #{_fwd.1} parent=1 // pred_fallthru
      _
    // Predicated region
    $region14: #{_fwd.1} parent=1 // pred_check
      _
    $region15: #{_fwd.1} parent=1 // pred_check_branch
      %21 = sbr.rel (0) target = $region17
    $region16: #{_fwd.1} parent=1 // pred_region
      %s23 = ssub.s32 1024, 1024
      %24 = vsyncadd [#allocation3], %s23
      %s25 = sshll.u32 [#allocation2], 4
      %s26 = int_to_ptr.vmem [resolvable:$true] %s25
      %31 = dma.hbm_to_vmem [thread:$0]  %s3, 1024, %s26, [#allocation3], 64, 64, 4
    $region17: #{_fwd.1} parent=1 // pred_fallthru
      _
    // Predicated region
    $region18: #{_fwd.1} parent=1 // pred_check
      _
    $region19: #{_fwd.1} parent=1 // pred_check_branch
      %33 = sbr.rel (0) target = $region21
    $region20: #{_fwd.1} parent=1 // pred_region
      _
    $region21: #{_fwd.1} parent=1 // pred_fallthru
      _
    // Predicated region
    $region22: #{_fwd.1} parent=1 // pred_check
      _
    $region23: #{_fwd.1} parent=1 // pred_check_branch
      %35 = sbr.rel (0) target = $region25
    $region24: #{_fwd.1} parent=1 // pred_region
      %s37 = ssub.s32 1024, 1024
      %38 = vsyncadd [#allocation5], %s37
      %s39 = sshll.u32 [#allocation4], 4
      %s40 = int_to_ptr.vmem [resolvable:$true] %s39
      %45 = dma.hbm_to_vmem [thread:$0]  %s5, 1024, %s40, [#allocation5], 64, 64, 4
    $region25: #{_fwd.1} parent=1 // pred_fallthru
      _
    // Predicated region
    $region26: #{_fwd.1} parent=1 // pred_check
      _
    $region27: #{_fwd.1} parent=1 // pred_check_branch
      %47 = sbr.rel (0) target = $region29
    $region28: #{_fwd.1} parent=1 // pred_region
      _
    $region29: #{_fwd.1} parent=1 // pred_fallthru
      _
    // Predicated region
    $region30: #{_fwd.1} parent=1 // pred_check
      _
    $region31: #{_fwd.1} parent=1 // pred_check_branch
      %49 = sbr.rel (0) target = $region33
    $region32: #{_fwd.1} parent=1 // pred_region
      %50 = dma.done [#allocation3], 1024
    $region33: #{_fwd.1} parent=1 // pred_fallthru
      _
    // Predicated region
    $region34: #{_fwd.1} parent=1 // pred_check
      _
    $region35: #{_fwd.1} parent=1 // pred_check_branch
      %52 = sbr.rel (0) target = $region37
    $region36: #{_fwd.1} parent=1 // pred_region
      %53 = dma.done [#allocation5], 1024
    $region37: #{_fwd.1} parent=1 // pred_fallthru
      _
    %v55 = vld [vmem:[%s0] sm:$0xff]
    %v56 = vld [vmem:[%s0 + $0x8] sm:$0xff]
    %v57 = vld [vmem:[%s0 + $0x10] sm:$0xff]
    %v58 = vld [vmem:[%s0 + $0x18] sm:$0xff]
    %v59 = vld [vmem:[%s1] sm:$0xf]
    %v60 = vld [vmem:[%s1 + $0x4] sm:$0xf]
    %v61 = vld [vmem:[%s1 + $0x8] sm:$0xf]
    %v62 = vld [vmem:[%s1 + $0xc] sm:$0xf]
    %v63 = vld [vmem:[%s1 + $0x10] sm:$0xf]
    %v64 = vld [vmem:[%s1 + $0x14] sm:$0xf]
    %v65 = vld [vmem:[%s1 + $0x18] sm:$0xf]
    %v66 = vld [vmem:[%s1 + $0x1c] sm:$0xf]
    %v67 = vld [vmem:[%s1 + $0x20] sm:$0xf]
    %v68 = vld [vmem:[%s1 + $0x24] sm:$0xf]
    %v69 = vld [vmem:[%s1 + $0x28] sm:$0xf]
    %v70 = vld [vmem:[%s1 + $0x2c] sm:$0xf]
    %v71 = vld [vmem:[%s1 + $0x30] sm:$0xf]
    %v72 = vld [vmem:[%s1 + $0x34] sm:$0xf]
    %v73 = vld [vmem:[%s1 + $0x38] sm:$0xf]
    %v74 = vld [vmem:[%s1 + $0x3c] sm:$0xf]
    %v75 = vld [vmem:[%s1 + $0x40] sm:$0xf]
    %v76 = vld [vmem:[%s1 + $0x44] sm:$0xf]
    %v77 = vld [vmem:[%s1 + $0x48] sm:$0xf]
    %v78 = vld [vmem:[%s1 + $0x4c] sm:$0xf]
    %v79 = vld [vmem:[%s1 + $0x50] sm:$0xf]
    %v80 = vld [vmem:[%s1 + $0x54] sm:$0xf]
    %v81 = vld [vmem:[%s1 + $0x58] sm:$0xf]
    %v82 = vld [vmem:[%s1 + $0x5c] sm:$0xf]
    %v83 = vld [vmem:[%s1 + $0x60] sm:$0xf]
    %v84 = vld [vmem:[%s1 + $0x64] sm:$0xf]
    %v85 = vld [vmem:[%s1 + $0x68] sm:$0xf]
    %v86 = vld [vmem:[%s1 + $0x6c] sm:$0xf]
    %v87 = vld [vmem:[%s1 + $0x70] sm:$0xf]
    %v88 = vld [vmem:[%s1 + $0x74] sm:$0xf]
    %v89 = vld [vmem:[%s1 + $0x78] sm:$0xf]
    %v90 = vld [vmem:[%s1 + $0x7c] sm:$0xf]
    %v91 = vld [vmem:[%s2] sm:$0x1]
    %v93 = vlaneseq
    %v94 = vshrl.u32 %v93, 7
    %v95 = vsub.s32 0, %v94
    %v96 = vrot.slane %v91, %v95
    %v102 = vunpack.c.l.b16 %v55
    %v103 = vunpack.c.h.b16 %v55
    %v104 = vunpack.c.l.b16 %v56
    %v105 = vunpack.c.h.b16 %v56
    %v106 = vunpack.c.l.b16 %v57
    %v107 = vunpack.c.h.b16 %v57
    %v108 = vunpack.c.l.b16 %v58
    %v109 = vunpack.c.h.b16 %v58
    %v110 = vpack.c.b16 %v104, %v102
    %v111 = vpack.c.b16 %v105, %v103
    %v112 = vpack.c.b16 %v108, %v106
    %v113 = vpack.c.b16 %v109, %v107
    %v150 = vunpack.c.l.b16 %v59
    %v151 = vunpack.c.l.b16 %v60
    %v152 = vunpack.c.l.b16 %v61
    %v153 = vunpack.c.l.b16 %v62
    %v154 = vunpack.c.l.b16 %v63
    %v155 = vunpack.c.l.b16 %v64
    %v156 = vunpack.c.l.b16 %v65
    %v157 = vunpack.c.l.b16 %v66
    %v158 = vunpack.c.l.b16 %v67
    %v159 = vunpack.c.l.b16 %v68
    %v160 = vunpack.c.l.b16 %v69
    %v161 = vunpack.c.l.b16 %v70
    %v162 = vunpack.c.l.b16 %v71
    %v163 = vunpack.c.l.b16 %v72
    %v164 = vunpack.c.l.b16 %v73
    %v165 = vunpack.c.l.b16 %v74
    %v166 = vunpack.c.l.b16 %v75
    %v167 = vunpack.c.l.b16 %v76
    %v168 = vunpack.c.l.b16 %v77
    %v169 = vunpack.c.l.b16 %v78
    %v170 = vunpack.c.l.b16 %v79
    %v171 = vunpack.c.l.b16 %v80
    %v172 = vunpack.c.l.b16 %v81
    %v173 = vunpack.c.l.b16 %v82
    %v174 = vunpack.c.l.b16 %v83
    %v175 = vunpack.c.l.b16 %v84
    %v176 = vunpack.c.l.b16 %v85
    %v177 = vunpack.c.l.b16 %v86
    %v178 = vunpack.c.l.b16 %v87
    %v179 = vunpack.c.l.b16 %v88
    %v180 = vunpack.c.l.b16 %v89
    %v181 = vunpack.c.l.b16 %v90
    %v182 = vpack.c.b16 %v151, %v150
    %v183 = vpack.c.b16 %v153, %v152
    %v184 = vpack.c.b16 %v155, %v154
    %v185 = vpack.c.b16 %v157, %v156
    %v186 = vpack.c.b16 %v159, %v158
    %v187 = vpack.c.b16 %v161, %v160
    %v188 = vpack.c.b16 %v163, %v162
    %v189 = vpack.c.b16 %v165, %v164
    %v190 = vpack.c.b16 %v167, %v166
    %v191 = vpack.c.b16 %v169, %v168
    %v192 = vpack.c.b16 %v171, %v170
    %v193 = vpack.c.b16 %v173, %v172
    %v194 = vpack.c.b16 %v175, %v174
    %v195 = vpack.c.b16 %v177, %v176
    %v196 = vpack.c.b16 %v179, %v178
    %v197 = vpack.c.b16 %v181, %v180
    %214 = vmatprep.subr.bf16.mxu0 0
    %215 = vmatpush1.bf16.msra.mxu0 %v189
    %216 = vmatprep.subr.bf16.mxu0 0
    %217 = vmatpush1.bf16.msra.mxu0 %v188
    %218 = vmatprep.subr.bf16.mxu0 0
    %219 = vmatpush1.bf16.msra.mxu0 %v187
    %220 = vmatprep.subr.bf16.mxu0 0
    %221 = vmatpush1.bf16.msra.mxu0 %v186
    %222 = vmatprep.subr.bf16.mxu0 0
    %223 = vmatpush1.bf16.msra.mxu0 %v185
    %224 = vmatprep.subr.bf16.mxu0 0
    %225 = vmatpush1.bf16.msra.mxu0 %v184
    %226 = vmatprep.subr.bf16.mxu0 0
    %227 = vmatpush1.bf16.msra.mxu0 %v183
    %228 = vmatprep.subr.bf16.mxu0 0
    %229 = vmatpush1.bf16.msra.mxu0 %v182
    %230 = vmatprep.subr.bf16.mxu0 0
    %231 = vmatpush2.bf16.msra.mxu0 %v197
    %232 = vmatprep.subr.bf16.mxu0 0
    %233 = vmatpush2.bf16.msra.mxu0 %v196
    %234 = vmatprep.subr.bf16.mxu0 0
    %235 = vmatpush2.bf16.msra.mxu0 %v195
    %236 = vmatprep.subr.bf16.mxu0 0
    %237 = vmatpush2.bf16.msra.mxu0 %v194
    %238 = vmatprep.subr.bf16.mxu0 0
    %239 = vmatpush2.bf16.msra.mxu0 %v193
    %240 = vmatprep.subr.bf16.mxu0 0
    %241 = vmatpush2.bf16.msra.mxu0 %v192
    %242 = vmatprep.subr.bf16.mxu0 0
    %243 = vmatpush2.bf16.msra.mxu0 %v191
    %244 = vmatprep.subr.bf16.mxu0 0
    %245 = vmatpush2.bf16.msra.mxu0 %v190
    %246 = vmatprep.mubr.bf16.mxu0 %v111
    %247 = vmatmul.mubr.bf16.gmra.mxu0 %v110
    %v248 = vpop.f32.mrf.mxu0
    %v249 = vadd.f32 %v96, %v248
    %v250 = vpop.f32.mrf.mxu0
    %v251 = vpop.f32.mrf.mxu0
    %v252 = vadd.f32 %v96, %v251
    %v253 = vpop.f32.mrf.mxu0
    %254 = vmatprep.mubr.bf16.mxu0 %v113
    %255 = vmatmul.mubr.bf16.gmra.mxu0 %v112
    %v256 = vpop.f32.mrf.mxu0
    %v257 = vadd.f32 %v96, %v256
    %v258 = vpop.f32.mrf.mxu0
    %v259 = vpop.f32.mrf.mxu0
    %v260 = vadd.f32 %v96, %v259
    %v261 = vpop.f32.mrf.mxu0
    %262 = vdwg.mxu0
    %v263 = vmax.f32 %v249, 0.0
    %v264 = vmax.f32 %v252, 0.0
    %v265 = vmax.f32 %v257, 0.0
    %v266 = vmax.f32 %v260, 0.0
    %v267 = vpack.c.bf16 %v264, %v263
    %v268 = vpack.c.bf16 %v266, %v265
    %v269 = vld [vmem:[#allocation2] sm:$0xf]
    %v270 = vld [vmem:[#allocation2 + $0x4] sm:$0xf]
    %v271 = vld [vmem:[#allocation2 + $0x8] sm:$0xf]
    %v272 = vld [vmem:[#allocation2 + $0xc] sm:$0xf]
    %v273 = vld [vmem:[#allocation2 + $0x10] sm:$0xf]
    %v274 = vld [vmem:[#allocation2 + $0x14] sm:$0xf]
    %v275 = vld [vmem:[#allocation2 + $0x18] sm:$0xf]
    %v276 = vld [vmem:[#allocation2 + $0x1c] sm:$0xf]
    %v277 = vld [vmem:[#allocation2 + $0x20] sm:$0xf]
    %v278 = vld [vmem:[#allocation2 + $0x24] sm:$0xf]
    %v279 = vld [vmem:[#allocation2 + $0x28] sm:$0xf]
    %v280 = vld [vmem:[#allocation2 + $0x2c] sm:$0xf]
    %v281 = vld [vmem:[#allocation2 + $0x30] sm:$0xf]
    %v282 = vld [vmem:[#allocation2 + $0x34] sm:$0xf]
    %v283 = vld [vmem:[#allocation2 + $0x38] sm:$0xf]
    %v284 = vld [vmem:[#allocation2 + $0x3c] sm:$0xf]
    %v285 = vld [vmem:[%s4] sm:$0x1]
    %v287 = vlaneseq
    %v288 = vshrl.u32 %v287, 7
    %v289 = vsub.s32 0, %v288
    %v290 = vrot.slane %v285, %v289
    %v308 = vunpack.c.l.b16 %v269
    %v309 = vunpack.c.l.b16 %v270
    %v310 = vunpack.c.l.b16 %v271
    %v311 = vunpack.c.l.b16 %v272
    %v312 = vunpack.c.l.b16 %v273
    %v313 = vunpack.c.l.b16 %v274
    %v314 = vunpack.c.l.b16 %v275
    %v315 = vunpack.c.l.b16 %v276
    %v316 = vunpack.c.l.b16 %v277
    %v317 = vunpack.c.l.b16 %v278
    %v318 = vunpack.c.l.b16 %v279
    %v319 = vunpack.c.l.b16 %v280
    %v320 = vunpack.c.l.b16 %v281
    %v321 = vunpack.c.l.b16 %v282
    %v322 = vunpack.c.l.b16 %v283
    %v323 = vunpack.c.l.b16 %v284
    %v324 = vpack.c.b16 %v309, %v308
    %v325 = vpack.c.b16 %v311, %v310
    %v326 = vpack.c.b16 %v313, %v312
    %v327 = vpack.c.b16 %v315, %v314
    %v328 = vpack.c.b16 %v317, %v316
    %v329 = vpack.c.b16 %v319, %v318
    %v330 = vpack.c.b16 %v321, %v320
    %v331 = vpack.c.b16 %v323, %v322
    %340 = vmatprep.subr.bf16.mxu0 0
    %341 = vmatpush1.bf16.msra.mxu0 %v331
    %342 = vmatprep.subr.bf16.mxu0 0
    %343 = vmatpush1.bf16.msra.mxu0 %v330
    %344 = vmatprep.subr.bf16.mxu0 0
    %345 = vmatpush1.bf16.msra.mxu0 %v329
    %346 = vmatprep.subr.bf16.mxu0 0
    %347 = vmatpush1.bf16.msra.mxu0 %v328
    %348 = vmatprep.subr.bf16.mxu0 0
    %349 = vmatpush1.bf16.msra.mxu0 %v327
    %350 = vmatprep.subr.bf16.mxu0 0
    %351 = vmatpush1.bf16.msra.mxu0 %v326
    %352 = vmatprep.subr.bf16.mxu0 0
    %353 = vmatpush1.bf16.msra.mxu0 %v325
    %354 = vmatprep.subr.bf16.mxu0 0
    %355 = vmatpush1.bf16.msra.mxu0 %v324
    %356 = vmatprep.subr.bf16.mxu0 0
    %357 = vmatpush2.bf16.msra.mxu0 0
    %358 = vmatprep.subr.bf16.mxu0 0
    %359 = vmatpush2.bf16.msra.mxu0 0
    %360 = vmatprep.subr.bf16.mxu0 0
    %361 = vmatpush2.bf16.msra.mxu0 0
    %362 = vmatprep.subr.bf16.mxu0 0
    %363 = vmatpush2.bf16.msra.mxu0 0
    %364 = vmatprep.subr.bf16.mxu0 0
    %365 = vmatpush2.bf16.msra.mxu0 0
    %366 = vmatprep.subr.bf16.mxu0 0
    %367 = vmatpush2.bf16.msra.mxu0 0
    %368 = vmatprep.subr.bf16.mxu0 0
    %369 = vmatpush2.bf16.msra.mxu0 0
    %370 = vmatprep.subr.bf16.mxu0 0
    %371 = vmatpush2.bf16.msra.mxu0 0
    %372 = vmatprep.mubr.bf16.mxu0 0
    %373 = vmatmul.mubr.bf16.gmra.mxu0 %v267
    %v374 = vpop.f32.mrf.mxu0
    %v375 = vadd.f32 %v290, %v374
    %v376 = vpop.f32.mrf.mxu0
    %v377 = vpop.f32.mrf.mxu0
    %v378 = vadd.f32 %v290, %v377
    %v379 = vpop.f32.mrf.mxu0
    %380 = vmatprep.mubr.bf16.mxu0 0
    %381 = vmatmul.mubr.bf16.gmra.mxu0 %v268
    %v382 = vpop.f32.mrf.mxu0
    %v383 = vadd.f32 %v290, %v382
    %v384 = vpop.f32.mrf.mxu0
    %v385 = vpop.f32.mrf.mxu0
    %v386 = vadd.f32 %v290, %v385
    %v387 = vpop.f32.mrf.mxu0
    %388 = vdwg.mxu0
    %v389 = vmax.f32 %v375, 0.0
    %v390 = vmax.f32 %v378, 0.0
    %v391 = vmax.f32 %v383, 0.0
    %v392 = vmax.f32 %v386, 0.0
    %v393 = vpack.c.bf16 %v390, %v389
    %v394 = vpack.c.bf16 %v392, %v391
    %v395 = vld [vmem:[#allocation4] sm:$0xf]
    %v396 = vld [vmem:[#allocation4 + $0x4] sm:$0xf]
    %v397 = vld [vmem:[#allocation4 + $0x8] sm:$0xf]
    %v398 = vld [vmem:[#allocation4 + $0xc] sm:$0xf]
    %v399 = vld [vmem:[#allocation4 + $0x10] sm:$0xf]
    %v400 = vld [vmem:[#allocation4 + $0x14] sm:$0xf]
    %v401 = vld [vmem:[#allocation4 + $0x18] sm:$0xf]
    %v402 = vld [vmem:[#allocation4 + $0x1c] sm:$0xf]
    %v403 = vld [vmem:[#allocation4 + $0x20] sm:$0xf]
    %v404 = vld [vmem:[#allocation4 + $0x24] sm:$0xf]
    %v405 = vld [vmem:[#allocation4 + $0x28] sm:$0xf]
    %v406 = vld [vmem:[#allocation4 + $0x2c] sm:$0xf]
    %v407 = vld [vmem:[#allocation4 + $0x30] sm:$0xf]
    %v408 = vld [vmem:[#allocation4 + $0x34] sm:$0xf]
    %v409 = vld [vmem:[#allocation4 + $0x38] sm:$0xf]
    %v410 = vld [vmem:[#allocation4 + $0x3c] sm:$0xf]
    %v411 = vld [vmem:[%s6] sm:$0x1]
    %v413 = vlaneseq
    %v414 = vshrl.u32 %v413, 7
    %v415 = vsub.s32 0, %v414
    %v416 = vrot.slane %v411, %v415
    %v434 = vunpack.c.l.b16 %v395
    %v435 = vunpack.c.l.b16 %v396
    %v436 = vunpack.c.l.b16 %v397
    %v437 = vunpack.c.l.b16 %v398
    %v438 = vunpack.c.l.b16 %v399
    %v439 = vunpack.c.l.b16 %v400
    %v440 = vunpack.c.l.b16 %v401
    %v441 = vunpack.c.l.b16 %v402
    %v442 = vunpack.c.l.b16 %v403
    %v443 = vunpack.c.l.b16 %v404
    %v444 = vunpack.c.l.b16 %v405
    %v445 = vunpack.c.l.b16 %v406
    %v446 = vunpack.c.l.b16 %v407
    %v447 = vunpack.c.l.b16 %v408
    %v448 = vunpack.c.l.b16 %v409
    %v449 = vunpack.c.l.b16 %v410
    %v450 = vpack.c.b16 %v435, %v434
    %v451 = vpack.c.b16 %v437, %v436
    %v452 = vpack.c.b16 %v439, %v438
    %v453 = vpack.c.b16 %v441, %v440
    %v454 = vpack.c.b16 %v443, %v442
    %v455 = vpack.c.b16 %v445, %v444
    %v456 = vpack.c.b16 %v447, %v446
    %v457 = vpack.c.b16 %v449, %v448
    %466 = vmatprep.subr.bf16.mxu0 0
    %467 = vmatpush1.bf16.msra.mxu0 %v457
    %468 = vmatprep.subr.bf16.mxu0 0
    %469 = vmatpush1.bf16.msra.mxu0 %v456
    %470 = vmatprep.subr.bf16.mxu0 0
    %471 = vmatpush1.bf16.msra.mxu0 %v455
    %472 = vmatprep.subr.bf16.mxu0 0
    %473 = vmatpush1.bf16.msra.mxu0 %v454
    %474 = vmatprep.subr.bf16.mxu0 0
    %475 = vmatpush1.bf16.msra.mxu0 %v453
    %476 = vmatprep.subr.bf16.mxu0 0
    %477 = vmatpush1.bf16.msra.mxu0 %v452
    %478 = vmatprep.subr.bf16.mxu0 0
    %479 = vmatpush1.bf16.msra.mxu0 %v451
    %480 = vmatprep.subr.bf16.mxu0 0
    %481 = vmatpush1.bf16.msra.mxu0 %v450
    %482 = vmatprep.subr.bf16.mxu0 0
    %483 = vmatpush2.bf16.msra.mxu0 0
    %484 = vmatprep.subr.bf16.mxu0 0
    %485 = vmatpush2.bf16.msra.mxu0 0
    %486 = vmatprep.subr.bf16.mxu0 0
    %487 = vmatpush2.bf16.msra.mxu0 0
    %488 = vmatprep.subr.bf16.mxu0 0
    %489 = vmatpush2.bf16.msra.mxu0 0
    %490 = vmatprep.subr.bf16.mxu0 0
    %491 = vmatpush2.bf16.msra.mxu0 0
    %492 = vmatprep.subr.bf16.mxu0 0
    %493 = vmatpush2.bf16.msra.mxu0 0
    %494 = vmatprep.subr.bf16.mxu0 0
    %495 = vmatpush2.bf16.msra.mxu0 0
    %496 = vmatprep.subr.bf16.mxu0 0
    %497 = vmatpush2.bf16.msra.mxu0 0
    %498 = vmatprep.mubr.bf16.mxu0 0
    %499 = vmatmul.mubr.bf16.gmra.mxu0 %v393
    %v500 = vpop.f32.mrf.mxu0
    %v501 = vadd.f32 %v416, %v500
    %v502 = vpop.f32.mrf.mxu0
    %v503 = vpop.f32.mrf.mxu0
    %v504 = vadd.f32 %v416, %v503
    %v505 = vpop.f32.mrf.mxu0
    %506 = vmatprep.mubr.bf16.mxu0 0
    %507 = vmatmul.mubr.bf16.gmra.mxu0 %v394
    %v508 = vpop.f32.mrf.mxu0
    %v509 = vadd.f32 %v416, %v508
    %v510 = vpop.f32.mrf.mxu0
    %v511 = vpop.f32.mrf.mxu0
    %v512 = vadd.f32 %v416, %v511
    %v513 = vpop.f32.mrf.mxu0
    %514 = vdwg.mxu0
    %515 = vst [vmem:[%s7] sm:$0xff] %v501
    %516 = vst [vmem:[%s7 + $0x8] sm:$0xff] %v504
    %517 = vst [vmem:[%s7 + $0x10] sm:$0xff] %v509
    %518 = vst [vmem:[%s7 + $0x18] sm:$0xff] %v512
    // Predicated region
    $region38: #{_fwd.1} parent=1 // pred_check
      _
    $region39: #{_fwd.1} parent=1 // pred_check_branch
      %520 = sbr.rel (0) target = $region41
    $region40: #{_fwd.1} parent=1 // pred_region
      _
    $region41: #{_fwd.1} parent=1 // pred_fallthru
      _
    // Predicated region
    $region42: #{_fwd.1} parent=1 // pred_check
      _
    $region43: #{_fwd.1} parent=1 // pred_check_branch
      %522 = sbr.rel (0) target = $region45
    $region44: #{_fwd.1} parent=1 // pred_region
      _
    $region45: #{_fwd.1} parent=1 // pred_fallthru
      _
    %523 = vsyncpa [#allocation3], 1
    %524 = vsyncpa [#allocation5], 1

</llo_original>
